<compile_context>
chip_gen: v7x
topology: tpu7x:2x2x1
jax: 0.10.0
libtpu: 0.0.40
codegen_flags: <defaults>
</compile_context>

<pallas_src>
import functools
import math

import numpy as np
import jax
import jax.numpy as jnp
from jax.experimental import pallas as pl
from jax.experimental.pallas import tpu as pltpu


# ----------------------------------------------------------------------------
# Circuit unitary construction (parameter setup, plain numpy — weights only,
# independent of the input, computed once).
# ----------------------------------------------------------------------------
def _rot_matrix(phi, theta, omega):
    """PennyLane Rot(phi, theta, omega) = RZ(omega) RY(theta) RZ(phi)."""
    c = np.cos(theta / 2.0)
    s = np.sin(theta / 2.0)
    return np.array(
        [
            [np.exp(-1j * (phi + omega) / 2) * c, -np.exp(1j * (phi - omega) / 2) * s],
            [np.exp(-1j * (phi - omega) / 2) * s, np.exp(1j * (phi + omega) / 2) * c],
        ],
        dtype=np.complex128,
    )


def _embed(ops, n):
    """Embed single-qubit ops (dict wire -> 2x2) into a 2**n matrix.
    Wire 0 is the most-significant bit (PennyLane convention)."""
    I2 = np.eye(2, dtype=np.complex128)
    M = np.ones((1, 1), dtype=np.complex128)
    for w in range(n):
        M = np.kron(M, ops.get(w, I2))
    return M


def _cnot(control, target, n):
    P0 = np.array([[1, 0], [0, 0]], dtype=np.complex128)
    P1 = np.array([[0, 0], [0, 1]], dtype=np.complex128)
    X = np.array([[0, 1], [1, 0]], dtype=np.complex128)
    return _embed({control: P0}, n) + _embed({control: P1, target: X}, n)


def strongly_entangling_unitary(weights, n):
    """Full 2**n x 2**n unitary of qml.StronglyEntanglingLayers(weights)."""
    dim = 2 ** n
    U = np.eye(dim, dtype=np.complex128)
    L = weights.shape[0]
    for layer in range(L):
        for w in range(n):
            phi, theta, omega = weights[layer, w]
            U = _embed({w: _rot_matrix(phi, theta, omega)}, n) @ U
        if n > 1:
            r = (layer % (n - 1)) + 1  # default StronglyEntanglingLayers ranges
            for w in range(n):
                U = _cnot(w, (w + r) % n, n) @ U
    return U


# ----------------------------------------------------------------------------
# Pallas kernel: normalize -> single fused (Re|Im) matmul -> |.|^2 -> scale
#                -> clamp.  One grid step per batch tile.
# ----------------------------------------------------------------------------
def _qdense_kernel(x_ref, m_ref, o_ref, *, pixels):
    x = x_ref[...].astype(jnp.float32)                      # (tb, D)
    # AmplitudeEmbedding normalize=True — one XLU reduce + one EUP rsqrt per tile.
    inv_norm = jax.lax.rsqrt(jnp.sum(x * x, axis=-1, keepdims=True))
    psi = x * inv_norm
    # Single MXU matmul against [Re(U_sel) | Im(U_sel)]  -> (tb, 2P), lane-dense.
    amp = jnp.dot(psi, m_ref[...], preferred_element_type=jnp.float32)
    ar = amp[:, :pixels]                                    # P is a lane multiple
    ai = amp[:, pixels:]
    probs = (ar * ar + ai * ai) * float(pixels)             # probs * pixels
    o_ref[...] = jnp.clip(probs, 0.0, 1.0).astype(o_ref.dtype)


def _round_up(a, b):
    return ((a + b - 1) // b) * b


def qdense2_undirected_forward(x_nchw, M, *, width, height, tile_b=128):
    """Forward pass of QDense2Undirected.

    x_nchw: (B, 1, W, H) float32
    M:      (D, 2P) float32 — [Re(U_sel).T | Im(U_sel).T] with
            U_sel = U[0:2P:2, 0::2], P = W*H, D = 2**(wires-1).
    """
    B = x_nchw.shape[0]
    pixels = width * height
    D, twoP = M.shape
    P = twoP // 2
    assert P == pixels

    x = x_nchw.reshape(B, -1)                               # b 1 w h -> b (w h)
    if x.shape[1] < D:                                      # AmplitudeEmbedding pad_with=0.1
        pad = jnp.full((B, D - x.shape[1]), 0.1, dtype=x.dtype)
        x = jnp.concatenate([x, pad], axis=1)

    # Batch tile: multiple of 8 (f32 sublane), capped at tile_b (MXU-friendly).
    tb = min(tile_b, _round_up(B, 8))
    Bp = _round_up(B, tb)
    if Bp != B:
        # Pad rows with ones (not zeros) so rsqrt never sees a zero norm.
        x = jnp.concatenate([x, jnp.ones((Bp - B, D), dtype=x.dtype)], axis=0)

    out = pl.pallas_call(
        functools.partial(_qdense_kernel, pixels=P),
        out_shape=jax.ShapeDtypeStruct((Bp, P), jnp.float32),
        grid=(Bp // tb,),                                    # batch tiles only
        in_specs=[
            pl.BlockSpec((tb, D), lambda i: (i, 0)),         # batch tile of psi input
            pl.BlockSpec((D, twoP), lambda i: (0, 0)),       # full fused weights, VMEM-resident
        ],
        out_specs=pl.BlockSpec((tb, P), lambda i: (i, 0)),   # lane-dense (>=256 wide) store
        compiler_params=pltpu.CompilerParams(
            dimension_semantics=("parallel",)),              # batch-parallel (megacore on v7x)
    )(x, M)

    return out[:B].reshape(B, 1, width, height)              # b (w h) -> b 1 w h


# ----------------------------------------------------------------------------
# Pure-JAX reference (same math, no Pallas) for a correctness check.
# ----------------------------------------------------------------------------
def _reference(x_nchw, M, *, width, height):
    B = x_nchw.shape[0]
    pixels = width * height
    D, twoP = M.shape
    P = twoP // 2
    x = x_nchw.reshape(B, -1)
    if x.shape[1] < D:
        x = jnp.concatenate([x, jnp.full((B, D - x.shape[1]), 0.1, x.dtype)], axis=1)
    psi = x / jnp.linalg.norm(x, axis=1, keepdims=True)
    amp = psi @ M
    ar, ai = amp[:, :P], amp[:, P:]
    probs = jnp.clip((ar * ar + ai * ai) * pixels, 0.0, 1.0)
    return probs.reshape(B, 1, width, height)


if __name__ == "__main__":
    # Module configuration (small, matching the forward's implied shapes).
    qdepth = 2
    width, height = 16, 16
    pixels = width * height                                  # 256
    wires = math.ceil(math.log2(pixels)) + 1                 # 9
    D = 2 ** (wires - 1)                                     # embedding dim = 256

    key = jax.random.PRNGKey(0)
    k_w, k_x = jax.random.split(key)

    # Deterministic synthetic parameters: torch.randn(shape) * 0.4 equivalent.
    weight_shape = (qdepth, wires, 3)                        # StronglyEntanglingLayers.shape
    weights = jax.random.normal(k_w, weight_shape, dtype=jnp.float32) * 0.4
    mapped = np.tanh(np.asarray(jax.device_get(weights), dtype=np.float64))  # qw_map.tanh

    # Build circuit unitary and select only the rows/columns the forward needs:
    #   columns 0::2  (initial state lives on even indices, last wire = |0>)
    #   rows    0:2*pixels:2  (probs[:, ::2][:, :pixels])
    U = strongly_entangling_unitary(mapped, wires)           # (2^wires, 2^wires) complex
    U_sel = U[0 : 2 * pixels : 2, 0::2]                      # (pixels, D)
    # Fused weight matrix [Re | Im] -> one MXU matmul in the kernel.
    M = jnp.asarray(
        np.concatenate([U_sel.real.T, U_sel.imag.T], axis=1), dtype=jnp.float32
    )                                                        # (D, 2*pixels)

    # Deterministic input, NCHW with a single channel.
    x = jax.random.uniform(k_x, (2, 1, width, height), dtype=jnp.float32)

    y = qdense2_undirected_forward(x, M, width=width, height=height)
    y = jax.block_until_ready(y)

    y_ref = _reference(x, M, width=width, height=height)
    assert y.shape == (2, 1, width, height)
    np.testing.assert_allclose(np.asarray(y), np.asarray(y_ref), rtol=1e-5, atol=1e-5)

    print("KERNEL_OK")
</pallas_src>

<mosaic_0001>
module attributes {stable_mosaic.version = 11 : i64} {
  func.func @_qdense_kernel(%arg0: i32, %arg1: memref<8x256xf32, #tpu.memory_space<vmem>>, %arg2: memref<256x512xf32, #tpu.memory_space<vmem>>, %arg3: memref<8x256xf32, #tpu.memory_space<vmem>>) attributes {dimension_semantics = [#tpu.dimension_semantics<parallel>], iteration_bounds = array<i64: 1>, scalar_prefetch = 0 : i64, scratch_operands = 0 : i64, tpu.core_type = #tpu.core_type<tc>, window_params = [{transform_indices = @transform_0, window_bounds = array<i64: 8, 256>}, {pipeline_mode = #tpu.pipeline_mode<synchronous>, transform_indices = @transform_1, window_bounds = array<i64: 256, 512>}, {transform_indices = @transform_2, window_bounds = array<i64: 8, 256>}]} {
    %c0 = arith.constant 0 : index
    %c0_0 = arith.constant 0 : index
    %0 = vector.load %arg1[%c0, %c0_0] : memref<8x256xf32, #tpu.memory_space<vmem>>, vector<8x256xf32>
    %1 = arith.mulf %0, %0 : vector<8x256xf32>
    %cst = arith.constant dense<0.000000e+00> : vector<8xf32>
    %2 = vector.multi_reduction <add>, %1, %cst [1] : vector<8x256xf32> to vector<8xf32>
    %3 = vector.shape_cast %2 : vector<8xf32> to vector<8x1xf32>
    %4 = math.rsqrt %3 : vector<8x1xf32>
    %5 = vector.broadcast %4 : vector<8x1xf32> to vector<8x256xf32>
    %6 = arith.mulf %0, %5 : vector<8x256xf32>
    %c0_1 = arith.constant 0 : index
    %c0_2 = arith.constant 0 : index
    %7 = vector.load %arg2[%c0_1, %c0_2] : memref<256x512xf32, #tpu.memory_space<vmem>>, vector<256x512xf32>
    %cst_3 = arith.constant dense<0.000000e+00> : vector<8x512xf32>
    %8 = tpu.matmul %6, %7, %cst_3 {dimension_numbers = #tpu.dot_dimension_numbers<[1], [0], [0], [1], [0, 0, 1, 1], [], []>} : vector<8x256xf32>, vector<256x512xf32>, vector<8x512xf32> -> vector<8x512xf32>
    %9 = vector.extract_strided_slice %8 {offsets = [0, 0], sizes = [8, 256], strides = [1, 1]} : vector<8x512xf32> to vector<8x256xf32>
    %10 = vector.extract_strided_slice %8 {offsets = [0, 256], sizes = [8, 256], strides = [1, 1]} : vector<8x512xf32> to vector<8x256xf32>
    %11 = arith.mulf %9, %9 : vector<8x256xf32>
    %12 = arith.mulf %10, %10 : vector<8x256xf32>
    %13 = arith.addf %11, %12 : vector<8x256xf32>
    %cst_4 = arith.constant 2.560000e+02 : f32
    %14 = vector.broadcast %cst_4 : f32 to vector<8x256xf32>
    %15 = arith.mulf %13, %14 : vector<8x256xf32>
    %cst_5 = arith.constant 0.000000e+00 : f32
    %cst_6 = arith.constant 1.000000e+00 : f32
    %16 = vector.broadcast %cst_5 : f32 to vector<8x256xf32>
    %17 = arith.maximumf %16, %15 : vector<8x256xf32>
    %18 = vector.broadcast %cst_6 : f32 to vector<8x256xf32>
    %19 = arith.minimumf %18, %17 : vector<8x256xf32>
    %c0_7 = arith.constant 0 : index
    %c0_8 = arith.constant 0 : index
    %20 = vector.load %arg3[%c0_7, %c0_8] : memref<8x256xf32, #tpu.memory_space<vmem>>, vector<8x256xf32>
    tpu.vector_store %arg3[%c0_7, %c0_8], %19 {strides = array<i32>} : memref<8x256xf32, #tpu.memory_space<vmem>>, vector<8x256xf32>,
    return
  }
  func.func @transform_0(%arg0: i32) -> (i32, i32) {
    %c0_i32 = arith.constant 0 : i32
    %c0_i32_0 = arith.constant 0 : i32
    return %arg0, %c0_i32 : i32, i32
  }
  func.func @transform_1(%arg0: i32) -> (i32, i32) {
    %c0_i32 = arith.constant 0 : i32
    %c0_i32_0 = arith.constant 0 : i32
    %c0_i32_1 = arith.constant 0 : i32
    return %c0_i32, %c0_i32_0 : i32, i32
  }
  func.func @transform_2(%arg0: i32) -> (i32, i32) {
    %c0_i32 = arith.constant 0 : i32
    %c0_i32_0 = arith.constant 0 : i32
    return %arg0, %c0_i32 : i32, i32
  }
}

</mosaic_0001>

<llo_original>
// kernel: tpu_custom_call.1
$region0: #{tpu_custom_call.1}
  #allocation0 [shape = 'u32[]', space=smem, size = 0x4, offset = 0x4, fixed_abs, tag = 'smem constant byte address 0x4 - core index']
  #allocation1 [shape = 'u32[144,128]{1,0:T(1,128)}', space=vmem, size = 0x12000, scoped, tag = 'internal scratch']
  %s0 = inlined_call_operand.hbm [shape: f32[8,256], index: 0, kind: input, shape index: {}]
  %s1 = inlined_call_operand.hbm [shape: f32[256,512], index: 1, kind: input, shape index: {}]
  %s2 = inlined_call_operand.hbm [shape: f32[8,256], index: 2, kind: output, shape index: {}]
  %s3 = sld [smem:[#allocation0]]
  $region26: #{tpu_custom_call.1} parent=0
    _
  %s5 = ssub.s32 1, %s3
  %s6 = scalar_select 0, %s5, %s3
  $region1: #{tpu_custom_call.1} parent=0
    #allocation2 [shape = 'u8[8192]{0}', space=vmem, size = 0x2000, scoped, tag = 'input window, operand 0, single buffered']
    #allocation3 [shape = 's32[1]{0}', space=sflag, size = 0x4, scoped, tag = 'scoped memory for tpu_custom_call.1']
    #allocation4 [shape = 's32[1]{0}', space=sflag, size = 0x4, scoped, tag = 'scoped memory for tpu_custom_call.1']
    #allocation5 [shape = 'u8[524288]{0}', space=vmem, size = 0x80000, scoped, tag = 'input window, operand 1, single buffered']
    #allocation6 [shape = 's32[1]{0}', space=sflag, size = 0x4, scoped, tag = 'scoped memory for tpu_custom_call.1']
    #allocation7 [shape = 'u8[8192]{0}', space=vmem, size = 0x2000, scoped, tag = 'output window, operand 0, single buffered']
    %7 = vsyncpa [#allocation3], 0
    %8 = vsyncpa [#allocation6], 0
    %9 = vsyncpa [#allocation4], 0
    // Predicated region
    $region2: #{tpu_custom_call.1} parent=1 // pred_check
      _
    $region3: #{tpu_custom_call.1} parent=1 // pred_check_branch
      %11 = sbr.rel (0) target = $region5
    $region4: #{tpu_custom_call.1} parent=1 // pred_region
      %s13 = ssub.s32 256, 256
      %14 = vsyncadd [#allocation3], %s13
      %s16 = sshll.u32 [#allocation2], 4
      %s17 = int_to_ptr.vmem [resolvable:$true] %s16
      %19 = dma.hbm_to_vmem [thread:$0]  %s0, 256, %s17, [#allocation3]
    $region5: #{tpu_custom_call.1} parent=1 // pred_fallthru
      _
    // Predicated region
    $region6: #{tpu_custom_call.1} parent=1 // pred_check
      _
    $region7: #{tpu_custom_call.1} parent=1 // pred_check_branch
      %21 = sbr.rel (0) target = $region9
    $region8: #{tpu_custom_call.1} parent=1 // pred_region
      %s23 = ssub.s32 16384, 16384
      %24 = vsyncadd [#allocation6], %s23
      %s25 = sshll.u32 [#allocation5], 4
      %s26 = int_to_ptr.vmem [resolvable:$true] %s25
      %31 = dma.hbm_to_vmem [thread:$0]  %s1, 16384, %s26, [#allocation6], 512, 512, 32
    $region9: #{tpu_custom_call.1} parent=1 // pred_fallthru
      _
    // Predicated region
    $region10: #{tpu_custom_call.1} parent=1 // pred_check
      _
    $region11: #{tpu_custom_call.1} parent=1 // pred_check_branch
      %33 = sbr.rel (0) target = $region13
    $region12: #{tpu_custom_call.1} parent=1 // pred_region
      %34 = dma.done [#allocation3], 256
    $region13: #{tpu_custom_call.1} parent=1 // pred_fallthru
      _
    // Predicated region
    $region14: #{tpu_custom_call.1} parent=1 // pred_check
      _
    $region15: #{tpu_custom_call.1} parent=1 // pred_check_branch
      %36 = sbr.rel (0) target = $region17
    $region16: #{tpu_custom_call.1} parent=1 // pred_region
      %37 = dma.done [#allocation6], 16384
    $region17: #{tpu_custom_call.1} parent=1 // pred_fallthru
      _
    %v38 = vld [vmem:[#allocation2] sm:$0xff]
    %v39 = vld [vmem:[#allocation2 + $0x8] sm:$0xff]
    %v40 = vmul.f32 %v38, %v38
    %v41 = vmul.f32 %v39, %v39
    %v42 = vadd.f32 %v40, %v41
    %43 = vadd.xlane.f32.xlu0 %v42
    %v44 = vpop.xlane.xlu0 %43
    %v45 = vrsqrt.pop %v44
    %v46 = vmul.f32 %v38, %v45
    %v47 = vmul.f32 %v39, %v45
    %v48 = vld [vmem:[#allocation5] sm:$0xff]
    %v49 = vld [vmem:[#allocation5 + $0x8] sm:$0xff]
    %v50 = vld [vmem:[#allocation5 + $0x10] sm:$0xff]
    %v51 = vld [vmem:[#allocation5 + $0x18] sm:$0xff]
    %v52 = vld [vmem:[#allocation5 + $0x20] sm:$0xff]
    %v53 = vld [vmem:[#allocation5 + $0x28] sm:$0xff]
    %v54 = vld [vmem:[#allocation5 + $0x30] sm:$0xff]
    %v55 = vld [vmem:[#allocation5 + $0x38] sm:$0xff]
    %v56 = vld [vmem:[#allocation5 + $0x40] sm:$0xff]
    %v57 = vld [vmem:[#allocation5 + $0x48] sm:$0xff]
    %v58 = vld [vmem:[#allocation5 + $0x50] sm:$0xff]
    %v59 = vld [vmem:[#allocation5 + $0x58] sm:$0xff]
    %v60 = vld [vmem:[#allocation5 + $0x60] sm:$0xff]
    %v61 = vld [vmem:[#allocation5 + $0x68] sm:$0xff]
    %v62 = vld [vmem:[#allocation5 + $0x70] sm:$0xff]
    %v63 = vld [vmem:[#allocation5 + $0x78] sm:$0xff]
    %v64 = vld [vmem:[#allocation5 + $0x80] sm:$0xff]
    %v65 = vld [vmem:[#allocation5 + $0x88] sm:$0xff]
    %v66 = vld [vmem:[#allocation5 + $0x90] sm:$0xff]
    %v67 = vld [vmem:[#allocation5 + $0x98] sm:$0xff]
    %v68 = vld [vmem:[#allocation5 + $0xa0] sm:$0xff]
    %v69 = vld [vmem:[#allocation5 + $0xa8] sm:$0xff]
    %v70 = vld [vmem:[#allocation5 + $0xb0] sm:$0xff]
    %v71 = vld [vmem:[#allocation5 + $0xb8] sm:$0xff]
    %v72 = vld [vmem:[#allocation5 + $0xc0] sm:$0xff]
    %v73 = vld [vmem:[#allocation5 + $0xc8] sm:$0xff]
    %v74 = vld [vmem:[#allocation5 + $0xd0] sm:$0xff]
    %v75 = vld [vmem:[#allocation5 + $0xd8] sm:$0xff]
    %v76 = vld [vmem:[#allocation5 + $0xe0] sm:$0xff]
    %v77 = vld [vmem:[#allocation5 + $0xe8] sm:$0xff]
    %v78 = vld [vmem:[#allocation5 + $0xf0] sm:$0xff]
    %v79 = vld [vmem:[#allocation5 + $0xf8] sm:$0xff]
    %v80 = vld [vmem:[#allocation5 + $0x100] sm:$0xff]
    %v81 = vld [vmem:[#allocation5 + $0x108] sm:$0xff]
    %v82 = vld [vmem:[#allocation5 + $0x110] sm:$0xff]
    %v83 = vld [vmem:[#allocation5 + $0x118] sm:$0xff]
    %v84 = vld [vmem:[#allocation5 + $0x120] sm:$0xff]
    %v85 = vld [vmem:[#allocation5 + $0x128] sm:$0xff]
    %v86 = vld [vmem:[#allocation5 + $0x130] sm:$0xff]
    %v87 = vld [vmem:[#allocation5 + $0x138] sm:$0xff]
    %v88 = vld [vmem:[#allocation5 + $0x140] sm:$0xff]
    %v89 = vld [vmem:[#allocation5 + $0x148] sm:$0xff]
    %v90 = vld [vmem:[#allocation5 + $0x150] sm:$0xff]
    %v91 = vld [vmem:[#allocation5 + $0x158] sm:$0xff]
    %v92 = vld [vmem:[#allocation5 + $0x160] sm:$0xff]
    %v93 = vld [vmem:[#allocation5 + $0x168] sm:$0xff]
    %v94 = vld [vmem:[#allocation5 + $0x170] sm:$0xff]
    %v95 = vld [vmem:[#allocation5 + $0x178] sm:$0xff]
    %v96 = vld [vmem:[#allocation5 + $0x180] sm:$0xff]
    %v97 = vld [vmem:[#allocation5 + $0x188] sm:$0xff]
    %v98 = vld [vmem:[#allocation5 + $0x190] sm:$0xff]
    %v99 = vld [vmem:[#allocation5 + $0x198] sm:$0xff]
    %v100 = vld [vmem:[#allocation5 + $0x1a0] sm:$0xff]
    %v101 = vld [vmem:[#allocation5 + $0x1a8] sm:$0xff]
    %v102 = vld [vmem:[#allocation5 + $0x1b0] sm:$0xff]
    %v103 = vld [vmem:[#allocation5 + $0x1b8] sm:$0xff]
    %v104 = vld [vmem:[#allocation5 + $0x1c0] sm:$0xff]
    %v105 = vld [vmem:[#allocation5 + $0x1c8] sm:$0xff]
    %v106 = vld [vmem:[#allocation5 + $0x1d0] sm:$0xff]
    %v107 = vld [vmem:[#allocation5 + $0x1d8] sm:$0xff]
    %v108 = vld [vmem:[#allocation5 + $0x1e0] sm:$0xff]
    %v109 = vld [vmem:[#allocation5 + $0x1e8] sm:$0xff]
    %v110 = vld [vmem:[#allocation5 + $0x1f0] sm:$0xff]
    %v111 = vld [vmem:[#allocation5 + $0x1f8] sm:$0xff]
    %v112 = vld [vmem:[#allocation5 + $0x200] sm:$0xff]
    %v113 = vld [vmem:[#allocation5 + $0x208] sm:$0xff]
    %v114 = vld [vmem:[#allocation5 + $0x210] sm:$0xff]
    %v115 = vld [vmem:[#allocation5 + $0x218] sm:$0xff]
    %v116 = vld [vmem:[#allocation5 + $0x220] sm:$0xff]
    %v117 = vld [vmem:[#allocation5 + $0x228] sm:$0xff]
    %v118 = vld [vmem:[#allocation5 + $0x230] sm:$0xff]
    %v119 = vld [vmem:[#allocation5 + $0x238] sm:$0xff]
    %v120 = vld [vmem:[#allocation5 + $0x240] sm:$0xff]
    %v121 = vld [vmem:[#allocation5 + $0x248] sm:$0xff]
    %v122 = vld [vmem:[#allocation5 + $0x250] sm:$0xff]
    %v123 = vld [vmem:[#allocation5 + $0x258] sm:$0xff]
    %v124 = vld [vmem:[#allocation5 + $0x260] sm:$0xff]
    %v125 = vld [vmem:[#allocation5 + $0x268] sm:$0xff]
    %v126 = vld [vmem:[#allocation5 + $0x270] sm:$0xff]
    %v127 = vld [vmem:[#allocation5 + $0x278] sm:$0xff]
    %v128 = vld [vmem:[#allocation5 + $0x280] sm:$0xff]
    %v129 = vld [vmem:[#allocation5 + $0x288] sm:$0xff]
    %v130 = vld [vmem:[#allocation5 + $0x290] sm:$0xff]
    %v131 = vld [vmem:[#allocation5 + $0x298] sm:$0xff]
    %v132 = vld [vmem:[#allocation5 + $0x2a0] sm:$0xff]
    %v133 = vld [vmem:[#allocation5 + $0x2a8] sm:$0xff]
    %v134 = vld [vmem:[#allocation5 + $0x2b0] sm:$0xff]
    %v135 = vld [vmem:[#allocation5 + $0x2b8] sm:$0xff]
    %v136 = vld [vmem:[#allocation5 + $0x2c0] sm:$0xff]
    %v137 = vld [vmem:[#allocation5 + $0x2c8] sm:$0xff]
    %v138 = vld [vmem:[#allocation5 + $0x2d0] sm:$0xff]
    %v139 = vld [vmem:[#allocation5 + $0x2d8] sm:$0xff]
    %v140 = vld [vmem:[#allocation5 + $0x2e0] sm:$0xff]
    %v141 = vld [vmem:[#allocation5 + $0x2e8] sm:$0xff]
    %v142 = vld [vmem:[#allocation5 + $0x2f0] sm:$0xff]
    %v143 = vld [vmem:[#allocation5 + $0x2f8] sm:$0xff]
    %v144 = vld [vmem:[#allocation5 + $0x300] sm:$0xff]
    %v145 = vld [vmem:[#allocation5 + $0x308] sm:$0xff]
    %v146 = vld [vmem:[#allocation5 + $0x310] sm:$0xff]
    %v147 = vld [vmem:[#allocation5 + $0x318] sm:$0xff]
    %v148 = vld [vmem:[#allocation5 + $0x320] sm:$0xff]
    %v149 = vld [vmem:[#allocation5 + $0x328] sm:$0xff]
    %v150 = vld [vmem:[#allocation5 + $0x330] sm:$0xff]
    %v151 = vld [vmem:[#allocation5 + $0x338] sm:$0xff]
    %v152 = vld [vmem:[#allocation5 + $0x340] sm:$0xff]
    %v153 = vld [vmem:[#allocation5 + $0x348] sm:$0xff]
    %v154 = vld [vmem:[#allocation5 + $0x350] sm:$0xff]
    %v155 = vld [vmem:[#allocation5 + $0x358] sm:$0xff]
    %v156 = vld [vmem:[#allocation5 + $0x360] sm:$0xff]
    %v157 = vld [vmem:[#allocation5 + $0x368] sm:$0xff]
    %v158 = vld [vmem:[#allocation5 + $0x370] sm:$0xff]
    %v159 = vld [vmem:[#allocation5 + $0x378] sm:$0xff]
    %v160 = vld [vmem:[#allocation5 + $0x380] sm:$0xff]
    %v161 = vld [vmem:[#allocation5 + $0x388] sm:$0xff]
    %v162 = vld [vmem:[#allocation5 + $0x390] sm:$0xff]
    %v163 = vld [vmem:[#allocation5 + $0x398] sm:$0xff]
    %v164 = vld [vmem:[#allocation5 + $0x3a0] sm:$0xff]
    %v165 = vld [vmem:[#allocation5 + $0x3a8] sm:$0xff]
    %v166 = vld [vmem:[#allocation5 + $0x3b0] sm:$0xff]
    %v167 = vld [vmem:[#allocation5 + $0x3b8] sm:$0xff]
    %v168 = vld [vmem:[#allocation5 + $0x3c0] sm:$0xff]
    %v169 = vld [vmem:[#allocation5 + $0x3c8] sm:$0xff]
    %v170 = vld [vmem:[#allocation5 + $0x3d0] sm:$0xff]
    %v171 = vld [vmem:[#allocation5 + $0x3d8] sm:$0xff]
    %v172 = vld [vmem:[#allocation5 + $0x3e0] sm:$0xff]
    %v173 = vld [vmem:[#allocation5 + $0x3e8] sm:$0xff]
    %v174 = vld [vmem:[#allocation5 + $0x3f0] sm:$0xff]
    %v175 = vld [vmem:[#allocation5 + $0x3f8] sm:$0xff]
    %176 = vmatprep.subr.mxu0 %v49
    %177 = vmatpush1.msra.mxu0 %v48
    %178 = vmatprep.subr.mxu0 %v53
    %179 = vmatpush1.msra.mxu0 %v52
    %180 = vmatprep.subr.mxu0 %v57
    %181 = vmatpush1.msra.mxu0 %v56
    %182 = vmatprep.subr.mxu0 %v61
    %183 = vmatpush1.msra.mxu0 %v60
    %184 = vmatprep.subr.mxu0 %v65
    %185 = vmatpush1.msra.mxu0 %v64
    %186 = vmatprep.subr.mxu0 %v69
    %187 = vmatpush1.msra.mxu0 %v68
    %188 = vmatprep.subr.mxu0 %v73
    %189 = vmatpush1.msra.mxu0 %v72
    %190 = vmatprep.subr.mxu0 %v77
    %191 = vmatpush1.msra.mxu0 %v76
    %192 = vmatprep.subr.mxu0 %v81
    %193 = vmatpush1.msra.mxu0 %v80
    %194 = vmatprep.subr.mxu0 %v85
    %195 = vmatpush1.msra.mxu0 %v84
    %196 = vmatprep.subr.mxu0 %v89
    %197 = vmatpush1.msra.mxu0 %v88
    %198 = vmatprep.subr.mxu0 %v93
    %199 = vmatpush1.msra.mxu0 %v92
    %200 = vmatprep.subr.mxu0 %v97
    %201 = vmatpush1.msra.mxu0 %v96
    %202 = vmatprep.subr.mxu0 %v101
    %203 = vmatpush1.msra.mxu0 %v100
    %204 = vmatprep.subr.mxu0 %v105
    %205 = vmatpush1.msra.mxu0 %v104
    %206 = vmatprep.subr.mxu0 %v109
    %207 = vmatpush1.msra.mxu0 %v108
    %208 = vmatprep.subr.mxu0 %v113
    %209 = vmatpush1.msra.mxu0 %v112
    %210 = vmatprep.subr.mxu0 %v117
    %211 = vmatpush1.msra.mxu0 %v116
    %212 = vmatprep.subr.mxu0 %v121
    %213 = vmatpush1.msra.mxu0 %v120
    %214 = vmatprep.subr.mxu0 %v125
    %215 = vmatpush1.msra.mxu0 %v124
    %216 = vmatprep.subr.mxu0 %v129
    %217 = vmatpush1.msra.mxu0 %v128
    %218 = vmatprep.subr.mxu0 %v133
    %219 = vmatpush1.msra.mxu0 %v132
    %220 = vmatprep.subr.mxu0 %v137
    %221 = vmatpush1.msra.mxu0 %v136
    %222 = vmatprep.subr.mxu0 %v141
    %223 = vmatpush1.msra.mxu0 %v140
    %224 = vmatprep.subr.mxu0 %v145
    %225 = vmatpush1.msra.mxu0 %v144
    %226 = vmatprep.subr.mxu0 %v149
    %227 = vmatpush1.msra.mxu0 %v148
    %228 = vmatprep.subr.mxu0 %v153
    %229 = vmatpush1.msra.mxu0 %v152
    %230 = vmatprep.subr.mxu0 %v157
    %231 = vmatpush1.msra.mxu0 %v156
    %232 = vmatprep.subr.mxu0 %v161
    %233 = vmatpush1.msra.mxu0 %v160
    %234 = vmatprep.subr.mxu0 %v165
    %235 = vmatpush1.msra.mxu0 %v164
    %236 = vmatprep.subr.mxu0 %v169
    %237 = vmatpush1.msra.mxu0 %v168
    %238 = vmatprep.subr.mxu0 %v173
    %239 = vmatpush1.msra.mxu0 %v172
    %240 = vmatprep.mubr.f32.mxu0 %v47
    %241 = vmatmul.mubr.f32.gmra.mrb[0].mxu0 %v46
    %v242 = vpop.f32.mrb[0].mxu0
    %v243 = vadd.f32 0.0, %v242
    %v244 = vpop.f32.mrb[0].mxu0
    %v245 = vadd.f32 0.0, %v244
    %246 = vdwg.mxu0
    %247 = vmatprep.subr.mxu0 %v51
    %248 = vmatpush1.msra.mxu0 %v50
    %249 = vmatprep.subr.mxu0 %v55
    %250 = vmatpush1.msra.mxu0 %v54
    %251 = vmatprep.subr.mxu0 %v59
    %252 = vmatpush1.msra.mxu0 %v58
    %253 = vmatprep.subr.mxu0 %v63
    %254 = vmatpush1.msra.mxu0 %v62
    %255 = vmatprep.subr.mxu0 %v67
    %256 = vmatpush1.msra.mxu0 %v66
    %257 = vmatprep.subr.mxu0 %v71
    %258 = vmatpush1.msra.mxu0 %v70
    %259 = vmatprep.subr.mxu0 %v75
    %260 = vmatpush1.msra.mxu0 %v74
    %261 = vmatprep.subr.mxu0 %v79
    %262 = vmatpush1.msra.mxu0 %v78
    %263 = vmatprep.subr.mxu0 %v83
    %264 = vmatpush1.msra.mxu0 %v82
    %265 = vmatprep.subr.mxu0 %v87
    %266 = vmatpush1.msra.mxu0 %v86
    %267 = vmatprep.subr.mxu0 %v91
    %268 = vmatpush1.msra.mxu0 %v90
    %269 = vmatprep.subr.mxu0 %v95
    %270 = vmatpush1.msra.mxu0 %v94
    %271 = vmatprep.subr.mxu0 %v99
    %272 = vmatpush1.msra.mxu0 %v98
    %273 = vmatprep.subr.mxu0 %v103
    %274 = vmatpush1.msra.mxu0 %v102
    %275 = vmatprep.subr.mxu0 %v107
    %276 = vmatpush1.msra.mxu0 %v106
    %277 = vmatprep.subr.mxu0 %v111
    %278 = vmatpush1.msra.mxu0 %v110
    %279 = vmatprep.subr.mxu0 %v115
    %280 = vmatpush1.msra.mxu0 %v114
    %281 = vmatprep.subr.mxu0 %v119
    %282 = vmatpush1.msra.mxu0 %v118
    %283 = vmatprep.subr.mxu0 %v123
    %284 = vmatpush1.msra.mxu0 %v122
    %285 = vmatprep.subr.mxu0 %v127
    %286 = vmatpush1.msra.mxu0 %v126
    %287 = vmatprep.subr.mxu0 %v131
    %288 = vmatpush1.msra.mxu0 %v130
    %289 = vmatprep.subr.mxu0 %v135
    %290 = vmatpush1.msra.mxu0 %v134
    %291 = vmatprep.subr.mxu0 %v139
    %292 = vmatpush1.msra.mxu0 %v138
    %293 = vmatprep.subr.mxu0 %v143
    %294 = vmatpush1.msra.mxu0 %v142
    %295 = vmatprep.subr.mxu0 %v147
    %296 = vmatpush1.msra.mxu0 %v146
    %297 = vmatprep.subr.mxu0 %v151
    %298 = vmatpush1.msra.mxu0 %v150
    %299 = vmatprep.subr.mxu0 %v155
    %300 = vmatpush1.msra.mxu0 %v154
    %301 = vmatprep.subr.mxu0 %v159
    %302 = vmatpush1.msra.mxu0 %v158
    %303 = vmatprep.subr.mxu0 %v163
    %304 = vmatpush1.msra.mxu0 %v162
    %305 = vmatprep.subr.mxu0 %v167
    %306 = vmatpush1.msra.mxu0 %v166
    %307 = vmatprep.subr.mxu0 %v171
    %308 = vmatpush1.msra.mxu0 %v170
    %309 = vmatprep.subr.mxu0 %v175
    %310 = vmatpush1.msra.mxu0 %v174
    %311 = vmatprep.mubr.f32.mxu0 %v47
    %312 = vmatmul.mubr.f32.gmra.mrb[0].mxu0 %v46
    %v313 = vpop.f32.mrb[0].mxu0
    %v314 = vadd.f32 0.0, %v313
    %v315 = vpop.f32.mrb[0].mxu0
    %v316 = vadd.f32 0.0, %v315
    %317 = vdwg.mxu0
    %v318 = vmul.f32 %v243, %v243
    %v319 = vmul.f32 %v245, %v245
    %v320 = vmul.f32 %v314, %v314
    %v321 = vmul.f32 %v316, %v316
    %v322 = vadd.f32 %v318, %v320
    %v323 = vadd.f32 %v319, %v321
    %v324 = vmul.f32 %v322, 256.0
    %v325 = vmul.f32 %v323, 256.0
    %v326 = vmax.f32 %v324, 0.0
    %v327 = vmax.f32 %v325, 0.0
    %v328 = vmin.f32 %v326, 1.0
    %v329 = vmin.f32 %v327, 1.0
    %330 = vst [vmem:[#allocation7] sm:$0xff] %v328
    %331 = vst [vmem:[#allocation7 + $0x8] sm:$0xff] %v329
    // Predicated region
    $region18: #{tpu_custom_call.1} parent=1 // pred_check
      _
    $region19: #{tpu_custom_call.1} parent=1 // pred_check_branch
      %333 = sbr.rel (0) target = $region21
    $region20: #{tpu_custom_call.1} parent=1 // pred_region
      %s335 = ssub.s32 256, 256
      %336 = vsyncadd [#allocation4], %s335
      %s338 = sshll.u32 [#allocation7], 4
      %s339 = int_to_ptr.vmem [resolvable:$true] %s338
      %341 = dma.vmem_to_hbm [thread:$0]  %s339, 256, %s2, [#allocation4]
    $region21: #{tpu_custom_call.1} parent=1 // pred_fallthru
      _
    // Predicated region
    $region22: #{tpu_custom_call.1} parent=1 // pred_check
      _
    $region23: #{tpu_custom_call.1} parent=1 // pred_check_branch
      %343 = sbr.rel (0) target = $region25
    $region24: #{tpu_custom_call.1} parent=1 // pred_region
      %344 = dma.done [#allocation4], 256
    $region25: #{tpu_custom_call.1} parent=1 // pred_fallthru
      _
    %345 = vsyncpa [#allocation3], 1
    %346 = vsyncpa [#allocation6], 1
    %347 = vsyncpa [#allocation4], 1

</llo_original>
